<compile_context>
chip_gen: v6e
topology: v6e:2x2x1
jax: 0.10.0
libtpu: 0.0.40
codegen_flags: <defaults>
</compile_context>

<pallas_src>
import math

import jax
import jax.numpy as jnp
from jax.experimental import pallas as pl
from jax.experimental.pallas import tpu as pltpu


def _round_up(a, b):
    return (a + b - 1) // b * b


def _mlp_kernel(x_ref, w1_ref, b1_ref, w2_ref, b2_ref, o_ref):
    # fc1 on the MXU, f32 accumulation.
    h = jnp.dot(x_ref[...], w1_ref[...], preferred_element_type=jnp.float32)
    h = h + b1_ref[...]
    # GELU (tanh approximation; tanh uses the EUP slot, nearly free).
    # TODO(synk): nn.GELU default is the exact erf form; the tanh approximation
    # differs by <~3e-4 absolute, well inside bf16 rounding noise.
    c = 0.7978845608028654  # sqrt(2/pi)
    h = 0.5 * h * (1.0 + jnp.tanh(c * (h + 0.044715 * h * h * h)))
    # fc2 on the MXU.
    h = h.astype(w2_ref.dtype)
    o = jnp.dot(h, w2_ref[...], preferred_element_type=jnp.float32)
    o_ref[...] = (o + b2_ref[...]).astype(o_ref.dtype)


def _pick_block_m(M, kp, hp, dp, ebytes, sub):
    """Largest M tile whose working set fits a conservative VMEM budget."""
    budget = 24 * 2**20
    resident = (kp * hp + hp * dp) * ebytes + (hp + dp) * 4
    m_cap = _round_up(max(M, 1), sub)
    for tm in (2048, 1024, 512, 256, 128, 64, 32, 16, 8):
        if tm % sub or tm > m_cap:
            continue
        work = resident + 2 * tm * kp * ebytes + 2 * tm * dp * 4 + tm * hp * 4
        if work <= budget:
            return tm
    return sub


def mlp_forward(x, fc1_w, fc1_b, fc2_w, fc2_b, *, block_m=None,
                compute_dtype=jnp.bfloat16):
    """Mlp forward pass.

    x:      (..., in_features)
    fc1_w:  (hidden_features, in_features)   -- PyTorch nn.Linear layout
    fc1_b:  (hidden_features,)
    fc2_w:  (out_features, hidden_features)
    fc2_b:  (out_features,)
    returns (..., out_features)
    """
    *lead, d_in = x.shape
    hidden, d_in_w = fc1_w.shape
    d_out, hidden_w = fc2_w.shape
    assert d_in_w == d_in and hidden_w == hidden

    M = math.prod(lead) if lead else 1
    ebytes = jnp.dtype(compute_dtype).itemsize
    sub = 16 if ebytes == 2 else 8

    kp = _round_up(d_in, 128)    # padded in_features   (lane axis of x / W1 rows)
    hp = _round_up(hidden, 128)  # padded hidden_features
    dp = _round_up(d_out, 128)   # padded out_features  (lane-dense output)

    if block_m is None:
        block_m = _pick_block_m(M, kp, hp, dp, ebytes, sub)
    block_m = _round_up(block_m, sub)
    mp = _round_up(max(M, 1), block_m)
    grid_m = mp // block_m

    # Pad + cast operands. Weights/biases are tiny; activation padding only
    # touches the ragged M edge and the (small) lane padding -- no transpose
    # of the large activation is ever done (the tiny weights are transposed).
    x2 = x.reshape(M, d_in).astype(compute_dtype)
    x2 = jnp.pad(x2, ((0, mp - M), (0, kp - d_in)))
    w1 = jnp.pad(fc1_w.T.astype(compute_dtype),
                 ((0, kp - d_in), (0, hp - hidden)))
    w2 = jnp.pad(fc2_w.T.astype(compute_dtype),
                 ((0, hp - hidden), (0, dp - d_out)))
    b1 = jnp.pad(fc1_b.astype(jnp.float32), (0, hp - hidden)).reshape(1, hp)
    b2 = jnp.pad(fc2_b.astype(jnp.float32), (0, dp - d_out)).reshape(1, dp)

    out_dtype = x.dtype
    obytes = jnp.dtype(out_dtype).itemsize

    cost = pl.CostEstimate(
        flops=2 * M * (d_in * hidden + hidden * d_out),
        transcendentals=M * hidden,
        bytes_accessed=(M * d_in * ebytes
                        + (d_in * hidden + hidden * d_out) * ebytes
                        + M * d_out * obytes),
    )

    est_vmem = ((2 * block_m * kp + kp * hp + hp * dp) * ebytes
                + 2 * block_m * dp * obytes
                + block_m * hp * 4 + (hp + dp) * 4)
    vmem_limit = int(min(64 * 2**20, max(32 * 2**20, 2 * est_vmem)))

    out = pl.pallas_call(
        _mlp_kernel,
        out_shape=jax.ShapeDtypeStruct((mp, dp), out_dtype),
        grid_spec=pltpu.PrefetchScalarGridSpec(
            num_scalar_prefetch=0,
            grid=(grid_m,),
            in_specs=[
                pl.BlockSpec((block_m, kp), lambda i: (i, 0)),  # x tile (streamed)
                pl.BlockSpec((kp, hp), lambda i: (0, 0)),       # W1 (resident)
                pl.BlockSpec((1, hp), lambda i: (0, 0)),        # b1 (resident)
                pl.BlockSpec((hp, dp), lambda i: (0, 0)),       # W2 (resident)
                pl.BlockSpec((1, dp), lambda i: (0, 0)),        # b2 (resident)
            ],
            out_specs=pl.BlockSpec((block_m, dp), lambda i: (i, 0)),
        ),
        compiler_params=pltpu.CompilerParams(
            dimension_semantics=("parallel",),
            vmem_limit_bytes=vmem_limit,
        ),
        cost_estimate=cost,
    )(x2, w1, b1, w2, b2)

    out = out[:M, :d_out]
    return out.reshape(*lead, d_out)


if __name__ == "__main__":
    # Small config consistent with Mlp: tokens (B, N) = (2, 16), in=out=32, hidden=32.
    B, N, D, Hf = 2, 16, 32, 32

    key = jax.random.PRNGKey(0)
    kx, k1, kb1, k2, kb2 = jax.random.split(key, 5)
    x = jax.random.normal(kx, (B, N, D), dtype=jnp.float32)
    fc1_w = 0.02 * jax.random.normal(k1, (Hf, D), dtype=jnp.float32)
    fc1_b = 0.01 * jax.random.normal(kb1, (Hf,), dtype=jnp.float32)
    fc2_w = 0.02 * jax.random.normal(k2, (D, Hf), dtype=jnp.float32)
    fc2_b = 0.01 * jax.random.normal(kb2, (D,), dtype=jnp.float32)

    # block_m=16 -> grid=(2,) so the tiled/pipelined path is exercised even
    # at this toy size (M = B*N = 32).
    out = mlp_forward(x, fc1_w, fc1_b, fc2_w, fc2_b, block_m=16)
    out = jax.block_until_ready(out)

    # Pure-JAX f32 reference (exact-erf GELU, nn.Linear semantics).
    h = x @ fc1_w.T + fc1_b
    h = jax.nn.gelu(h, approximate=False)
    ref = h @ fc2_w.T + fc2_b

    assert out.shape == (B, N, D)
    err = float(jnp.max(jnp.abs(out - ref)))
    assert jnp.allclose(out, ref, rtol=2e-2, atol=2e-3), err
    print("KERNEL_OK")
</pallas_src>

<mosaic_0001>
module attributes {stable_mosaic.version = 11 : i64} {
  func.func @_mlp_kernel(%arg0: i32, %arg1: memref<16x128xbf16, #tpu.memory_space<vmem>>, %arg2: memref<128x128xbf16, #tpu.memory_space<vmem>>, %arg3: memref<1x128xf32, #tpu.memory_space<vmem>>, %arg4: memref<128x128xbf16, #tpu.memory_space<vmem>>, %arg5: memref<1x128xf32, #tpu.memory_space<vmem>>, %arg6: memref<16x128xf32, #tpu.memory_space<vmem>>) attributes {dimension_semantics = [#tpu.dimension_semantics<parallel>], iteration_bounds = array<i64: 2>, scalar_prefetch = 0 : i64, scratch_operands = 0 : i64, tpu.core_type = #tpu.core_type<tc>, window_params = [{transform_indices = @transform_0, window_bounds = array<i64: 16, 128>}, {pipeline_mode = #tpu.pipeline_mode<synchronous>, transform_indices = @transform_1, window_bounds = array<i64: 128, 128>}, {pipeline_mode = #tpu.pipeline_mode<synchronous>, transform_indices = @transform_2, window_bounds = array<i64: 1, 128>}, {pipeline_mode = #tpu.pipeline_mode<synchronous>, transform_indices = @transform_3, window_bounds = array<i64: 128, 128>}, {pipeline_mode = #tpu.pipeline_mode<synchronous>, transform_indices = @transform_4, window_bounds = array<i64: 1, 128>}, {transform_indices = @transform_5, window_bounds = array<i64: 16, 128>}]} {
    %c0 = arith.constant 0 : index
    %c0_0 = arith.constant 0 : index
    %0 = vector.load %arg1[%c0, %c0_0] : memref<16x128xbf16, #tpu.memory_space<vmem>>, vector<16x128xbf16>
    %c0_1 = arith.constant 0 : index
    %c0_2 = arith.constant 0 : index
    %1 = vector.load %arg2[%c0_1, %c0_2] : memref<128x128xbf16, #tpu.memory_space<vmem>>, vector<128x128xbf16>
    %cst = arith.constant dense<0.000000e+00> : vector<16x128xf32>
    %2 = tpu.matmul %0, %1, %cst {dimension_numbers = #tpu.dot_dimension_numbers<[1], [0], [0], [1], [0, 0, 1, 1], [], []>} : vector<16x128xbf16>, vector<128x128xbf16>, vector<16x128xf32> -> vector<16x128xf32>
    %c0_3 = arith.constant 0 : index
    %c0_4 = arith.constant 0 : index
    %3 = vector.load %arg3[%c0_3, %c0_4] : memref<1x128xf32, #tpu.memory_space<vmem>>, vector<1x128xf32>
    %4 = vector.broadcast %3 : vector<1x128xf32> to vector<16x128xf32>
    %5 = arith.addf %2, %4 : vector<16x128xf32>
    %cst_5 = arith.constant 5.000000e-01 : f32
    %6 = vector.broadcast %cst_5 : f32 to vector<16x128xf32>
    %7 = arith.mulf %6, %5 : vector<16x128xf32>
    %cst_6 = arith.constant 4.471500e-02 : f32
    %8 = vector.broadcast %cst_6 : f32 to vector<16x128xf32>
    %9 = arith.mulf %8, %5 : vector<16x128xf32>
    %10 = arith.mulf %9, %5 : vector<16x128xf32>
    %11 = arith.mulf %10, %5 : vector<16x128xf32>
    %12 = arith.addf %5, %11 : vector<16x128xf32>
    %cst_7 = arith.constant 0.797884583 : f32
    %13 = vector.broadcast %cst_7 : f32 to vector<16x128xf32>
    %14 = arith.mulf %13, %12 : vector<16x128xf32>
    %15 = math.tanh %14 : vector<16x128xf32>
    %cst_8 = arith.constant 1.000000e+00 : f32
    %16 = vector.broadcast %cst_8 : f32 to vector<16x128xf32>
    %17 = arith.addf %16, %15 : vector<16x128xf32>
    %18 = arith.mulf %7, %17 : vector<16x128xf32>
    %19 = arith.truncf %18 : vector<16x128xf32> to vector<16x128xbf16>
    %c0_9 = arith.constant 0 : index
    %c0_10 = arith.constant 0 : index
    %20 = vector.load %arg4[%c0_9, %c0_10] : memref<128x128xbf16, #tpu.memory_space<vmem>>, vector<128x128xbf16>
    %cst_11 = arith.constant dense<0.000000e+00> : vector<16x128xf32>
    %21 = tpu.matmul %19, %20, %cst_11 {dimension_numbers = #tpu.dot_dimension_numbers<[1], [0], [0], [1], [0, 0, 1, 1], [], []>} : vector<16x128xbf16>, vector<128x128xbf16>, vector<16x128xf32> -> vector<16x128xf32>
    %c0_12 = arith.constant 0 : index
    %c0_13 = arith.constant 0 : index
    %22 = vector.load %arg5[%c0_12, %c0_13] : memref<1x128xf32, #tpu.memory_space<vmem>>, vector<1x128xf32>
    %23 = vector.broadcast %22 : vector<1x128xf32> to vector<16x128xf32>
    %24 = arith.addf %21, %23 : vector<16x128xf32>
    %c0_14 = arith.constant 0 : index
    %c0_15 = arith.constant 0 : index
    %25 = vector.load %arg6[%c0_14, %c0_15] : memref<16x128xf32, #tpu.memory_space<vmem>>, vector<16x128xf32>
    tpu.vector_store %arg6[%c0_14, %c0_15], %24 {strides = array<i32>} : memref<16x128xf32, #tpu.memory_space<vmem>>, vector<16x128xf32>,
    return
  }
  func.func @transform_0(%arg0: i32) -> (i32, i32) {
    %c0_i32 = arith.constant 0 : i32
    %c0_i32_0 = arith.constant 0 : i32
    return %arg0, %c0_i32 : i32, i32
  }
  func.func @transform_1(%arg0: i32) -> (i32, i32) {
    %c0_i32 = arith.constant 0 : i32
    %c0_i32_0 = arith.constant 0 : i32
    %c0_i32_1 = arith.constant 0 : i32
    return %c0_i32, %c0_i32_0 : i32, i32
  }
  func.func @transform_2(%arg0: i32) -> (i32, i32) {
    %c0_i32 = arith.constant 0 : i32
    %c0_i32_0 = arith.constant 0 : i32
    %c0_i32_1 = arith.constant 0 : i32
    return %c0_i32, %c0_i32_0 : i32, i32
  }
  func.func @transform_3(%arg0: i32) -> (i32, i32) {
    %c0_i32 = arith.constant 0 : i32
    %c0_i32_0 = arith.constant 0 : i32
    %c0_i32_1 = arith.constant 0 : i32
    return %c0_i32, %c0_i32_0 : i32, i32
  }
  func.func @transform_4(%arg0: i32) -> (i32, i32) {
    %c0_i32 = arith.constant 0 : i32
    %c0_i32_0 = arith.constant 0 : i32
    %c0_i32_1 = arith.constant 0 : i32
    return %c0_i32, %c0_i32_0 : i32, i32
  }
  func.func @transform_5(%arg0: i32) -> (i32, i32) {
    %c0_i32 = arith.constant 0 : i32
    %c0_i32_0 = arith.constant 0 : i32
    return %arg0, %c0_i32 : i32, i32
  }
}

</mosaic_0001>

<llo_original>
// kernel: tpu_custom_call.1
$region0: #{tpu_custom_call.1}
  #allocation0 [shape = 'u32[]', space=smem, size = 0x4, offset = 0x4, fixed_abs, tag = 'smem constant byte address 0x4 - core index']
  #allocation1 [shape = 'u32[144,128]{1,0:T(1,128)}', space=vmem, size = 0x12000, scoped, tag = 'internal scratch']
  %s0 = inlined_call_operand.hbm [shape: bf16[32,128], index: 0, kind: input, shape index: {}]
  %s1 = inlined_call_operand.hbm [shape: bf16[128,128], index: 1, kind: input, shape index: {}]
  %s2 = inlined_call_operand.vmem [shape: f32[1,128], index: 2, kind: input, shape index: {}]
  %s3 = inlined_call_operand.hbm [shape: bf16[128,128], index: 3, kind: input, shape index: {}]
  %s4 = inlined_call_operand.vmem [shape: f32[1,128], index: 4, kind: input, shape index: {}]
  %s5 = inlined_call_operand.hbm [shape: f32[32,128], index: 5, kind: output, shape index: {}]
  %s6 = sld [smem:[#allocation0]]
  $region65: #{tpu_custom_call.1} parent=0
    _
  %s8 = ssub.s32 1, %s6
  %s9 = scalar_select 0, %s8, %s6
  $region1: #{tpu_custom_call.1} parent=0
    #allocation2 [shape = 'u8[8192]{0}', space=vmem, size = 0x2000, scoped, tag = 'input window, operand 0']
    #allocation3 [shape = 's32[2]{0}', space=sflag, size = 0x8, scoped, tag = 'scoped memory for tpu_custom_call.1']
    #allocation4 [shape = 's32[2]{0}', space=sflag, size = 0x8, scoped, tag = 'scoped memory for tpu_custom_call.1']
    #allocation5 [shape = 'u8[32768]{0}', space=vmem, size = 0x8000, scoped, tag = 'input window, operand 1, single buffered']
    #allocation6 [shape = 's32[1]{0}', space=sflag, size = 0x4, scoped, tag = 'scoped memory for tpu_custom_call.1']
    #allocation7 [shape = 'u8[32768]{0}', space=vmem, size = 0x8000, scoped, tag = 'input window, operand 3, single buffered']
    #allocation8 [shape = 'u8[16384]{0}', space=vmem, size = 0x4000, scoped, tag = 'output window, operand 0']
    %10 = vsyncpa [#allocation3], 0
    %s11 = scalar_lea.sflag [#allocation3], 1
    %12 = vsyncpa %s11, 0
    %13 = vsyncpa [#allocation6], 0
    %14 = vsyncpa [#allocation4], 0
    %s15 = scalar_lea.sflag [#allocation4], 1
    %16 = vsyncpa %s15, 0
    loop: start=0, step=1, limit=4
    $region2: #{tpu_custom_call.1} parent=1 // loop_pre_header
      _
    $region3: #{tpu_custom_call.1} parent=1 // loop_header
      %s18 = sphi 0, %s22
      %p19 = scmp.ge.s32.totalorder %s18, 4
      %s28 = sphi 0, %s30
      %s31 = sphi 0, %s28
      %s32 = sphi 0, %s31
      %s48 = sphi 0, %s32
      %s52 = sphi 0, %s52
      %s54 = sphi 0, %s52
      %s55 = sphi 0, %s54
      %s69 = sphi 0, %s55
      %s73 = sphi 0, %s73
      %s75 = sphi 0, %s73
      %s76 = sphi 0, %s75
      %s90 = sphi 0, %s76
      %s94 = sphi 0, %s94
      %s96 = sphi 0, %s94
      %s97 = sphi 0, %s96
      %s111 = sphi 0, %s97
      %s115 = sphi 0, %s115
      %s117 = sphi 0, %s115
      %s118 = sphi 0, %s117
      %s132 = sphi 0, %s118
      %s138 = sphi 0, %s140
      %s141 = sphi 0, %s138
      %s142 = sphi 0, %s141
      %s158 = sphi 0, %s142
    $region4: #{tpu_custom_call.1} parent=1 // loop_header_branch
      %21 = sbr.rel (%p19) target = $region8
    $region5: #{tpu_custom_call.1} parent=1 // loop_body
      %s23 = ssub.s32 %s18, 1
      %s24 = ssub.s32 %s18, 2
      %s25 = sadd.s32 %s18, 1
      %s26 = ssub.s32 %s18, %s25
      %p27 = scmp.eq.s32.totalorder %s26, 0
      %s29 = sadd.s32 %s28, 1
      %s30 = scalar_select %p27, %s28, %s29
      %p33 = pneg %p27
      %p34 = scmp.eq.s32.totalorder %s18, 1
      %p35 = por %p33, %p34
      %p36 = scmp.ne.s32.totalorder %s28, %s31
      %p37 = scmp.eq.s32.totalorder %s18, 0
      %p38 = por %p36, %p37
      %p39 = scmp.ne.s32.totalorder %s28, %s31
      %p40 = scmp.eq.s32.totalorder %s23, 1
      %p41 = por %p39, %p40
      %p42 = scmp.ne.s32.totalorder %s31, %s32
      %p43 = scmp.eq.s32.totalorder %s23, 0
      %p44 = por %p42, %p43
      %p45 = scmp.ne.s32.totalorder %s31, %s32
      %p46 = scmp.eq.s32.totalorder %s24, 1
      %p47 = por %p45, %p46
      %p49 = scmp.ne.s32.totalorder %s32, %s48
      %p50 = scmp.eq.s32.totalorder %s24, 0
      %p51 = por %p49, %p50
      %s53 = sadd.s32 %s52, 1
      %p56 = scmp.eq.s32.totalorder %s18, 1
      %p57 = scmp.ne.s32.totalorder %s52, %s54
      %p58 = scmp.eq.s32.totalorder %s18, 0
      %p59 = por %p57, %p58
      %p60 = scmp.ne.s32.totalorder %s52, %s54
      %p61 = scmp.eq.s32.totalorder %s23, 1
      %p62 = por %p60, %p61
      %p63 = scmp.ne.s32.totalorder %s54, %s55
      %p64 = scmp.eq.s32.totalorder %s23, 0
      %p65 = por %p63, %p64
      %p66 = scmp.ne.s32.totalorder %s54, %s55
      %p67 = scmp.eq.s32.totalorder %s24, 1
      %p68 = por %p66, %p67
      %p70 = scmp.ne.s32.totalorder %s55, %s69
      %p71 = scmp.eq.s32.totalorder %s24, 0
      %p72 = por %p70, %p71
      %s74 = sadd.s32 %s73, 1
      %p77 = scmp.eq.s32.totalorder %s18, 1
      %p78 = scmp.ne.s32.totalorder %s73, %s75
      %p79 = scmp.eq.s32.totalorder %s18, 0
      %p80 = por %p78, %p79
      %p81 = scmp.ne.s32.totalorder %s73, %s75
      %p82 = scmp.eq.s32.totalorder %s23, 1
      %p83 = por %p81, %p82
      %p84 = scmp.ne.s32.totalorder %s75, %s76
      %p85 = scmp.eq.s32.totalorder %s23, 0
      %p86 = por %p84, %p85
      %p87 = scmp.ne.s32.totalorder %s75, %s76
      %p88 = scmp.eq.s32.totalorder %s24, 1
      %p89 = por %p87, %p88
      %p91 = scmp.ne.s32.totalorder %s76, %s90
      %p92 = scmp.eq.s32.totalorder %s24, 0
      %p93 = por %p91, %p92
      %s95 = sadd.s32 %s94, 1
      %p98 = scmp.eq.s32.totalorder %s18, 1
      %p99 = scmp.ne.s32.totalorder %s94, %s96
      %p100 = scmp.eq.s32.totalorder %s18, 0
      %p101 = por %p99, %p100
      %p102 = scmp.ne.s32.totalorder %s94, %s96
      %p103 = scmp.eq.s32.totalorder %s23, 1
      %p104 = por %p102, %p103
      %p105 = scmp.ne.s32.totalorder %s96, %s97
      %p106 = scmp.eq.s32.totalorder %s23, 0
      %p107 = por %p105, %p106
      %p108 = scmp.ne.s32.totalorder %s96, %s97
      %p109 = scmp.eq.s32.totalorder %s24, 1
      %p110 = por %p108, %p109
      %p112 = scmp.ne.s32.totalorder %s97, %s111
      %p113 = scmp.eq.s32.totalorder %s24, 0
      %p114 = por %p112, %p113
      %s116 = sadd.s32 %s115, 1
      %p119 = scmp.eq.s32.totalorder %s18, 1
      %p120 = scmp.ne.s32.totalorder %s115, %s117
      %p121 = scmp.eq.s32.totalorder %s18, 0
      %p122 = por %p120, %p121
      %p123 = scmp.ne.s32.totalorder %s115, %s117
      %p124 = scmp.eq.s32.totalorder %s23, 1
      %p125 = por %p123, %p124
      %p126 = scmp.ne.s32.totalorder %s117, %s118
      %p127 = scmp.eq.s32.totalorder %s23, 0
      %p128 = por %p126, %p127
      %p129 = scmp.ne.s32.totalorder %s117, %s118
      %p130 = scmp.eq.s32.totalorder %s24, 1
      %p131 = por %p129, %p130
      %p133 = scmp.ne.s32.totalorder %s118, %s132
      %p134 = scmp.eq.s32.totalorder %s24, 0
      %p135 = por %p133, %p134
      %s136 = ssub.s32 %s18, %s25
      %p137 = scmp.eq.s32.totalorder %s136, 0
      %s139 = sadd.s32 %s138, 1
      %s140 = scalar_select %p137, %s138, %s139
      %p143 = pneg %p137
      %p144 = scmp.eq.s32.totalorder %s18, 1
      %p145 = por %p143, %p144
      %p146 = scmp.ne.s32.totalorder %s138, %s141
      %p147 = scmp.eq.s32.totalorder %s18, 0
      %p148 = por %p146, %p147
      %p149 = scmp.ne.s32.totalorder %s138, %s141
      %p150 = scmp.eq.s32.totalorder %s23, 1
      %p151 = por %p149, %p150
      %p152 = scmp.ne.s32.totalorder %s141, %s142
      %p153 = scmp.eq.s32.totalorder %s23, 0
      %p154 = por %p152, %p153
      %p155 = scmp.ne.s32.totalorder %s141, %s142
      %p156 = scmp.eq.s32.totalorder %s24, 1
      %p157 = por %p155, %p156
      %p159 = scmp.ne.s32.totalorder %s142, %s158
      %p160 = scmp.eq.s32.totalorder %s24, 0
      %p161 = por %p159, %p160
      %p162 = scmp.le.s32.totalorder 1, %s18
      %p163 = scmp.lt.s32.totalorder %s18, 3
      %p164 = pnand %p162, %p163
      %p165 = pneg %p164
      // Predicated region
      $region9: #{tpu_custom_call.1} parent=5 // pred_check
        _
      $region10: #{tpu_custom_call.1} parent=5 // pred_check_branch
        %167 = sbr.rel (%p164) target = $region12
      $region11: #{tpu_custom_call.1} parent=5 // pred_region
        %s168 = ssub.s32 %s18, 1
        // Predicated region
        $region13: #{tpu_custom_call.1} parent=11 // pred_check
          %p169 = pneg %p65
        $region14: #{tpu_custom_call.1} parent=11 // pred_check_branch
          %171 = sbr.rel (%p169) target = $region16
        $region15: #{tpu_custom_call.1} parent=11 // pred_region
          %s173 = ssub.s32 1024, 1024
          %174 = vsyncadd [#allocation6], %s173
          %s175 = sshll.u32 [#allocation5], 4
          %s176 = int_to_ptr.vmem [resolvable:$true] %s175
          %181 = dma.hbm_to_vmem [thread:$0]  %s1, 1024, %s176, [#allocation6], 64, 64, 4
        $region16: #{tpu_custom_call.1} parent=11 // pred_fallthru
          _
        // Predicated region
        $region17: #{tpu_custom_call.1} parent=11 // pred_check
          %p182 = pneg %p86
        $region18: #{tpu_custom_call.1} parent=11 // pred_check_branch
          %184 = sbr.rel (%p182) target = $region20
        $region19: #{tpu_custom_call.1} parent=11 // pred_region
          _
        $region20: #{tpu_custom_call.1} parent=11 // pred_fallthru
          _
        // Predicated region
        $region21: #{tpu_custom_call.1} parent=11 // pred_check
          %p185 = pneg %p107
        $region22: #{tpu_custom_call.1} parent=11 // pred_check_branch
          %187 = sbr.rel (%p185) target = $region24
        $region23: #{tpu_custom_call.1} parent=11 // pred_region
          %s189 = ssub.s32 1024, 1024
          %190 = vsyncadd [#allocation6], %s189
          %s191 = sshll.u32 [#allocation7], 4
          %s192 = int_to_ptr.vmem [resolvable:$true] %s191
          %197 = dma.hbm_to_vmem [thread:$0]  %s3, 1024, %s192, [#allocation6], 64, 64, 4
        $region24: #{tpu_custom_call.1} parent=11 // pred_fallthru
          _
        // Predicated region
        $region25: #{tpu_custom_call.1} parent=11 // pred_check
          %p198 = pneg %p128
        $region26: #{tpu_custom_call.1} parent=11 // pred_check_branch
          %200 = sbr.rel (%p198) target = $region28
        $region27: #{tpu_custom_call.1} parent=11 // pred_region
          _
        $region28: #{tpu_custom_call.1} parent=11 // pred_fallthru
          _
      $region12: #{tpu_custom_call.1} parent=5 // pred_fallthru
        _
      %p201 = scmp.lt.s32.totalorder %s18, 2
      // Predicated region
      $region29: #{tpu_custom_call.1} parent=5 // pred_check
        %p202 = pneg %p201
      $region30: #{tpu_custom_call.1} parent=5 // pred_check_branch
        %204 = sbr.rel (%p202) target = $region32
      $region31: #{tpu_custom_call.1} parent=5 // pred_region
        // Predicated region
        $region33: #{tpu_custom_call.1} parent=31 // pred_check
          %p205 = pneg %p38
        $region34: #{tpu_custom_call.1} parent=31 // pred_check_branch
          %207 = sbr.rel (%p205) target = $region36
        $region35: #{tpu_custom_call.1} parent=31 // pred_region
          %s208 = sand.u32 %s28, 1
          %s209 = scalar_lea.sflag [#allocation3], %s208
          %s210 = sand.u32 %s28, 1
          %s211 = smul.addr %s210, 8
          %s212 = scalar_lea.vmem [#allocation2], %s211
          %s213 = smul.u32 2, %s18
          %s215 = ssub.s32 128, 128
          %216 = vsyncadd %s209, %s215
          %s217 = smul.addr %s213, 64
          %s218 = scalar_lea.hbm %s0, %s217
          %s219 = sshll.u32 %s212, 4
          %s220 = int_to_ptr.vmem [resolvable:$true] %s219
          %225 = dma.hbm_to_vmem [thread:$0]  %s218, 128, %s220, %s209, 64, 64, 4
        $region36: #{tpu_custom_call.1} parent=31 // pred_fallthru
          _
      $region32: #{tpu_custom_call.1} parent=5 // pred_fallthru
        _
      %p226 = scmp.le.s32.totalorder 1, %s18
      %p227 = scmp.lt.s32.totalorder %s18, 3
      %p228 = pnand %p226, %p227
      %p229 = pneg %p228
      // Predicated region
      $region37: #{tpu_custom_call.1} parent=5 // pred_check
        _
      $region38: #{tpu_custom_call.1} parent=5 // pred_check_branch
        %231 = sbr.rel (%p228) target = $region40
      $region39: #{tpu_custom_call.1} parent=5 // pred_region
        %s232 = ssub.s32 %s18, 1
        %s233 = sand.u32 %s31, 1
        %s234 = scalar_lea.sflag [#allocation3], %s233
        %s235 = sand.u32 %s31, 1
        %s236 = smul.addr %s235, 8
        %s237 = scalar_lea.vmem [#allocation2], %s236
        // Predicated region
        $region41: #{tpu_custom_call.1} parent=39 // pred_check
          %p238 = pneg %p44
        $region42: #{tpu_custom_call.1} parent=39 // pred_check_branch
          %240 = sbr.rel (%p238) target = $region44
        $region43: #{tpu_custom_call.1} parent=39 // pred_region
          %241 = dma.done %s234, 128
        $region44: #{tpu_custom_call.1} parent=39 // pred_fallthru
          _
        // Predicated region
        $region45: #{tpu_custom_call.1} parent=39 // pred_check
          %p242 = pneg %p65
        $region46: #{tpu_custom_call.1} parent=39 // pred_check_branch
          %244 = sbr.rel (%p242) target = $region48
        $region47: #{tpu_custom_call.1} parent=39 // pred_region
          %245 = dma.done [#allocation6], 1024
        $region48: #{tpu_custom_call.1} parent=39 // pred_fallthru
          _
        // Predicated region
        $region49: #{tpu_custom_call.1} parent=39 // pred_check
          %p246 = pneg %p107
        $region50: #{tpu_custom_call.1} parent=39 // pred_check_branch
          %248 = sbr.rel (%p246) target = $region52
        $region51: #{tpu_custom_call.1} parent=39 // pred_region
          %249 = dma.done [#allocation6], 1024
        $region52: #{tpu_custom_call.1} parent=39 // pred_fallthru
          _
        %s250 = sand.u32 %s31, 1
        %s251 = scalar_lea.sflag [#allocation3], %s250
        %s252 = sand.u32 %s31, 1
        %s253 = smul.addr %s252, 8
        %s254 = scalar_lea.vmem [#allocation2], %s253
        %p255 = pneg %p44
        %p256 = pneg %p41
        %p257 = pneg %p65
        %p258 = pneg %p62
        %p259 = pneg %p86
        %p260 = pneg %p83
        %p261 = pneg %p107
        %p262 = pneg %p104
        %p263 = pneg %p128
        %p264 = pneg %p125
        %p265 = pneg %p154
        %p266 = pneg %p151
        %s267 = sand.u32 %s141, 1
        %s268 = scalar_lea.sflag [#allocation4], %s267
        %s269 = sand.u32 %s141, 1
        %s270 = smul.addr %s269, 16
        %s271 = scalar_lea.vmem [#allocation8], %s270
        %s272 = smul.u32 2, %s23
        %s273 = smul.u32 2, %s23
        %v275 = vld [vmem:[%s237] sm:$0xf]
        %v276 = vld [vmem:[%s237 + $0x4] sm:$0xf]
        %v277 = vld [vmem:[#allocation5] sm:$0xf]
        %v278 = vld [vmem:[#allocation5 + $0x4] sm:$0xf]
        %v279 = vld [vmem:[#allocation5 + $0x8] sm:$0xf]
        %v280 = vld [vmem:[#allocation5 + $0xc] sm:$0xf]
        %v281 = vld [vmem:[#allocation5 + $0x10] sm:$0xf]
        %v282 = vld [vmem:[#allocation5 + $0x14] sm:$0xf]
        %v283 = vld [vmem:[#allocation5 + $0x18] sm:$0xf]
        %v284 = vld [vmem:[#allocation5 + $0x1c] sm:$0xf]
        %v285 = vld [vmem:[#allocation5 + $0x20] sm:$0xf]
        %v286 = vld [vmem:[#allocation5 + $0x24] sm:$0xf]
        %v287 = vld [vmem:[#allocation5 + $0x28] sm:$0xf]
        %v288 = vld [vmem:[#allocation5 + $0x2c] sm:$0xf]
        %v289 = vld [vmem:[#allocation5 + $0x30] sm:$0xf]
        %v290 = vld [vmem:[#allocation5 + $0x34] sm:$0xf]
        %v291 = vld [vmem:[#allocation5 + $0x38] sm:$0xf]
        %v292 = vld [vmem:[#allocation5 + $0x3c] sm:$0xf]
        %v293 = vld [vmem:[%s2] sm:$0x1]
        %v295 = vlaneseq
        %v296 = vshrl.u32 %v295, 7
        %v297 = vsub.s32 0, %v296
        %v298 = vrot.slane %v293, %v297
        %v302 = vunpack.c.l.b16 %v275
        %v303 = vunpack.c.l.b16 %v276
        %v304 = vpack.c.b16 %v303, %v302
        %v322 = vunpack.c.l.b16 %v277
        %v323 = vunpack.c.l.b16 %v278
        %v324 = vunpack.c.l.b16 %v279
        %v325 = vunpack.c.l.b16 %v280
        %v326 = vunpack.c.l.b16 %v281
        %v327 = vunpack.c.l.b16 %v282
        %v328 = vunpack.c.l.b16 %v283
        %v329 = vunpack.c.l.b16 %v284
        %v330 = vunpack.c.l.b16 %v285
        %v331 = vunpack.c.l.b16 %v286
        %v332 = vunpack.c.l.b16 %v287
        %v333 = vunpack.c.l.b16 %v288
        %v334 = vunpack.c.l.b16 %v289
        %v335 = vunpack.c.l.b16 %v290
        %v336 = vunpack.c.l.b16 %v291
        %v337 = vunpack.c.l.b16 %v292
        %v338 = vpack.c.b16 %v323, %v322
        %v339 = vpack.c.b16 %v325, %v324
        %v340 = vpack.c.b16 %v327, %v326
        %v341 = vpack.c.b16 %v329, %v328
        %v342 = vpack.c.b16 %v331, %v330
        %v343 = vpack.c.b16 %v333, %v332
        %v344 = vpack.c.b16 %v335, %v334
        %v345 = vpack.c.b16 %v337, %v336
        %354 = vmatprep.subr.bf16.mxu0 0
        %355 = vmatpush1.bf16.msra.mxu0 %v345
        %356 = vmatprep.subr.bf16.mxu0 0
        %357 = vmatpush1.bf16.msra.mxu0 %v344
        %358 = vmatprep.subr.bf16.mxu0 0
        %359 = vmatpush1.bf16.msra.mxu0 %v343
        %360 = vmatprep.subr.bf16.mxu0 0
        %361 = vmatpush1.bf16.msra.mxu0 %v342
        %362 = vmatprep.subr.bf16.mxu0 0
        %363 = vmatpush1.bf16.msra.mxu0 %v341
        %364 = vmatprep.subr.bf16.mxu0 0
        %365 = vmatpush1.bf16.msra.mxu0 %v340
        %366 = vmatprep.subr.bf16.mxu0 0
        %367 = vmatpush1.bf16.msra.mxu0 %v339
        %368 = vmatprep.subr.bf16.mxu0 0
        %369 = vmatpush1.bf16.msra.mxu0 %v338
        %370 = vmatprep.subr.bf16.mxu0 0
        %371 = vmatpush2.bf16.msra.mxu0 0
        %372 = vmatprep.subr.bf16.mxu0 0
        %373 = vmatpush2.bf16.msra.mxu0 0
        %374 = vmatprep.subr.bf16.mxu0 0
        %375 = vmatpush2.bf16.msra.mxu0 0
        %376 = vmatprep.subr.bf16.mxu0 0
        %377 = vmatpush2.bf16.msra.mxu0 0
        %378 = vmatprep.subr.bf16.mxu0 0
        %379 = vmatpush2.bf16.msra.mxu0 0
        %380 = vmatprep.subr.bf16.mxu0 0
        %381 = vmatpush2.bf16.msra.mxu0 0
        %382 = vmatprep.subr.bf16.mxu0 0
        %383 = vmatpush2.bf16.msra.mxu0 0
        %384 = vmatprep.subr.bf16.mxu0 0
        %385 = vmatpush2.bf16.msra.mxu0 0
        %386 = vmatprep.mubr.bf16.mxu0 0
        %387 = vmatmul.mubr.bf16.gmra.mxu0 %v304
        %v388 = vpop.f32.mrf.mxu0
        %v389 = vadd.f32 %v298, %v388
        %v390 = vpop.f32.mrf.mxu0
        %v391 = vpop.f32.mrf.mxu0
        %v392 = vadd.f32 %v298, %v391
        %v393 = vpop.f32.mrf.mxu0
        %394 = vdwg.mxu0
        %v395 = vmul.f32 %v389, 0.5
        %v396 = vmul.f32 %v392, 0.5
        %v397 = vmul.f32 %v389, 0.044715
        %v398 = vmul.f32 %v392, 0.044715
        %v399 = vmul.f32 %v397, %v389
        %v400 = vmul.f32 %v398, %v392
        %v401 = vmul.f32 %v399, %v389
        %v402 = vmul.f32 %v400, %v392
        %v403 = vadd.f32 %v389, %v401
        %v404 = vadd.f32 %v392, %v402
        %v405 = vmul.f32 %v403, 0.7978846
        %v406 = vmul.f32 %v404, 0.7978846
        %v407 = vtanh.pop %v405
        %v408 = vtanh.pop %v406
        %v409 = vadd.f32 %v407, 1.0
        %v410 = vadd.f32 %v408, 1.0
        %v411 = vmul.f32 %v395, %v409
        %v412 = vmul.f32 %v396, %v410
        %v413 = vpack.c.bf16 %v412, %v411
        %v414 = vld [vmem:[#allocation7] sm:$0xf]
        %v415 = vld [vmem:[#allocation7 + $0x4] sm:$0xf]
        %v416 = vld [vmem:[#allocation7 + $0x8] sm:$0xf]
        %v417 = vld [vmem:[#allocation7 + $0xc] sm:$0xf]
        %v418 = vld [vmem:[#allocation7 + $0x10] sm:$0xf]
        %v419 = vld [vmem:[#allocation7 + $0x14] sm:$0xf]
        %v420 = vld [vmem:[#allocation7 + $0x18] sm:$0xf]
        %v421 = vld [vmem:[#allocation7 + $0x1c] sm:$0xf]
        %v422 = vld [vmem:[#allocation7 + $0x20] sm:$0xf]
        %v423 = vld [vmem:[#allocation7 + $0x24] sm:$0xf]
        %v424 = vld [vmem:[#allocation7 + $0x28] sm:$0xf]
        %v425 = vld [vmem:[#allocation7 + $0x2c] sm:$0xf]
        %v426 = vld [vmem:[#allocation7 + $0x30] sm:$0xf]
        %v427 = vld [vmem:[#allocation7 + $0x34] sm:$0xf]
        %v428 = vld [vmem:[#allocation7 + $0x38] sm:$0xf]
        %v429 = vld [vmem:[#allocation7 + $0x3c] sm:$0xf]
        %v430 = vld [vmem:[%s4] sm:$0x1]
        %v432 = vlaneseq
        %v433 = vshrl.u32 %v432, 7
        %v434 = vsub.s32 0, %v433
        %v435 = vrot.slane %v430, %v434
        %v453 = vunpack.c.l.b16 %v414
        %v454 = vunpack.c.l.b16 %v415
        %v455 = vunpack.c.l.b16 %v416
        %v456 = vunpack.c.l.b16 %v417
        %v457 = vunpack.c.l.b16 %v418
        %v458 = vunpack.c.l.b16 %v419
        %v459 = vunpack.c.l.b16 %v420
        %v460 = vunpack.c.l.b16 %v421
        %v461 = vunpack.c.l.b16 %v422
        %v462 = vunpack.c.l.b16 %v423
        %v463 = vunpack.c.l.b16 %v424
        %v464 = vunpack.c.l.b16 %v425
        %v465 = vunpack.c.l.b16 %v426
        %v466 = vunpack.c.l.b16 %v427
        %v467 = vunpack.c.l.b16 %v428
        %v468 = vunpack.c.l.b16 %v429
        %v469 = vpack.c.b16 %v454, %v453
        %v470 = vpack.c.b16 %v456, %v455
        %v471 = vpack.c.b16 %v458, %v457
        %v472 = vpack.c.b16 %v460, %v459
        %v473 = vpack.c.b16 %v462, %v461
        %v474 = vpack.c.b16 %v464, %v463
        %v475 = vpack.c.b16 %v466, %v465
        %v476 = vpack.c.b16 %v468, %v467
        %485 = vmatprep.subr.bf16.mxu0 0
        %486 = vmatpush1.bf16.msra.mxu0 %v476
        %487 = vmatprep.subr.bf16.mxu0 0
        %488 = vmatpush1.bf16.msra.mxu0 %v475
        %489 = vmatprep.subr.bf16.mxu0 0
        %490 = vmatpush1.bf16.msra.mxu0 %v474
        %491 = vmatprep.subr.bf16.mxu0 0
        %492 = vmatpush1.bf16.msra.mxu0 %v473
        %493 = vmatprep.subr.bf16.mxu0 0
        %494 = vmatpush1.bf16.msra.mxu0 %v472
        %495 = vmatprep.subr.bf16.mxu0 0
        %496 = vmatpush1.bf16.msra.mxu0 %v471
        %497 = vmatprep.subr.bf16.mxu0 0
        %498 = vmatpush1.bf16.msra.mxu0 %v470
        %499 = vmatprep.subr.bf16.mxu0 0
        %500 = vmatpush1.bf16.msra.mxu0 %v469
        %501 = vmatprep.subr.bf16.mxu0 0
        %502 = vmatpush2.bf16.msra.mxu0 0
        %503 = vmatprep.subr.bf16.mxu0 0
        %504 = vmatpush2.bf16.msra.mxu0 0
        %505 = vmatprep.subr.bf16.mxu0 0
        %506 = vmatpush2.bf16.msra.mxu0 0
        %507 = vmatprep.subr.bf16.mxu0 0
        %508 = vmatpush2.bf16.msra.mxu0 0
        %509 = vmatprep.subr.bf16.mxu0 0
        %510 = vmatpush2.bf16.msra.mxu0 0
        %511 = vmatprep.subr.bf16.mxu0 0
        %512 = vmatpush2.bf16.msra.mxu0 0
        %513 = vmatprep.subr.bf16.mxu0 0
        %514 = vmatpush2.bf16.msra.mxu0 0
        %515 = vmatprep.subr.bf16.mxu0 0
        %516 = vmatpush2.bf16.msra.mxu0 0
        %517 = vmatprep.mubr.bf16.mxu0 0
        %518 = vmatmul.mubr.bf16.gmra.mxu0 %v413
        %v519 = vpop.f32.mrf.mxu0
        %v520 = vadd.f32 %v435, %v519
        %v521 = vpop.f32.mrf.mxu0
        %v522 = vpop.f32.mrf.mxu0
        %v523 = vadd.f32 %v435, %v522
        %v524 = vpop.f32.mrf.mxu0
        %525 = vdwg.mxu0
        %526 = vst [vmem:[%s271] sm:$0xff] %v520
        %527 = vst [vmem:[%s271 + $0x8] sm:$0xff] %v523
        %s528 = sand.u32 %s141, 1
        %s529 = scalar_lea.sflag [#allocation4], %s528
        %s530 = sand.u32 %s141, 1
        %s531 = smul.addr %s530, 16
        %s532 = scalar_lea.vmem [#allocation8], %s531
        // Predicated region
        $region53: #{tpu_custom_call.1} parent=39 // pred_check
          %p533 = pneg %p151
        $region54: #{tpu_custom_call.1} parent=39 // pred_check_branch
          %535 = sbr.rel (%p533) target = $region56
        $region55: #{tpu_custom_call.1} parent=39 // pred_region
          %s536 = smul.u32 2, %s23
          %s538 = ssub.s32 256, 256
          %539 = vsyncadd %s529, %s538
          %s540 = smul.addr %s536, 128
          %s541 = scalar_lea.hbm %s5, %s540
          %s542 = sshll.u32 %s532, 4
          %s543 = int_to_ptr.vmem [resolvable:$true] %s542
          %548 = dma.vmem_to_hbm [thread:$0]  %s543, 256, %s541, %s529, 128, 128, 8
        $region56: #{tpu_custom_call.1} parent=39 // pred_fallthru
          _
      $region40: #{tpu_custom_call.1} parent=5 // pred_fallthru
        _
      %p549 = scmp.le.s32.totalorder 2, %s18
      // Predicated region
      $region57: #{tpu_custom_call.1} parent=5 // pred_check
        %p550 = pneg %p549
      $region58: #{tpu_custom_call.1} parent=5 // pred_check_branch
        %552 = sbr.rel (%p550) target = $region60
      $region59: #{tpu_custom_call.1} parent=5 // pred_region
        %s553 = ssub.s32 %s18, 2
        // Predicated region
        $region61: #{tpu_custom_call.1} parent=59 // pred_check
          %p554 = pneg %p157
        $region62: #{tpu_custom_call.1} parent=59 // pred_check_branch
          %556 = sbr.rel (%p554) target = $region64
        $region63: #{tpu_custom_call.1} parent=59 // pred_region
          %s557 = sand.u32 %s142, 1
          %s558 = scalar_lea.sflag [#allocation4], %s557
          %s559 = sand.u32 %s142, 1
          %s560 = smul.addr %s559, 16
          %s561 = scalar_lea.vmem [#allocation8], %s560
          %562 = dma.done %s558, 256
        $region64: #{tpu_custom_call.1} parent=59 // pred_fallthru
          _
      $region60: #{tpu_custom_call.1} parent=5 // pred_fallthru
        _
    $region6: #{tpu_custom_call.1} parent=1 // loop_footer
      %s22 = sadd.s32 1, %s18
    $region7: #{tpu_custom_call.1} parent=1 // loop_footer_branch
      %17 = sbr.rel target = $region3
    $region8: #{tpu_custom_call.1} parent=1 // loop_exit
      _
    %563 = vsyncpa [#allocation3], 1
    %s564 = scalar_lea.sflag [#allocation3], 1
    %565 = vsyncpa %s564, 1
    %566 = vsyncpa [#allocation6], 1
    %567 = vsyncpa [#allocation4], 1
    %s568 = scalar_lea.sflag [#allocation4], 1
    %569 = vsyncpa %s568, 1

</llo_original>
